<compile_context>
chip_gen: v5e
topology: v5e:2x2
jax: 0.10.0
libtpu: 0.0.40
codegen_flags: <defaults>
</compile_context>

<pallas_src>
import numpy as np
import jax
import jax.numpy as jnp
from jax.experimental import pallas as pl
from jax.experimental.pallas import tpu as pltpu

# ----------------------------- config (small, synthetic) ---------------------
PATCH = 14
C_FEAT = 128          # lane-aligned synthetic ViT embedding dim (vitl would be 1024)
HIDDEN = 4 * C_FEAT   # 512
NUM_BLOCKS = 4        # synthetic depth (vitl uses 24 blocks, layer_idxs [4,11,17,23])
LAYER_IDXS = [0, 1, 2, 3]
ALPHA = 1.0           # prompt-depth fusion weight in the synthetic depth head
EPS = 1e-6

VMEM_LIMIT_BYTES = 48 * 1024 * 1024   # below physical VMEM on v5e/v6e (128MiB) and v7x (64MiB)


def _cparams(*sem):
    return pltpu.CompilerParams(dimension_semantics=sem,
                                vmem_limit_bytes=VMEM_LIMIT_BYTES)


def _round_up(x, m):
    return (x + m - 1) // m * m


# ----------------------------- pallas kernels --------------------------------
def patch_embed_kernel(x_ref, w_ref, b_ref, o_ref):
    # bf16 patches @ bf16 weights -> f32 accumulate (+ f32 bias).
    # The (x - mean)/std normalization is already folded into w/b.
    o_ref[...] = (jnp.dot(x_ref[...], w_ref[...],
                          preferred_element_type=jnp.float32) + b_ref[...])


def fused_blocks_kernel(x_ref, g_ref, be_ref, w1_ref, b1_ref, w2_ref, b2_ref,
                        feat_ref, acc_ref):
    # TODO(synk): DINOv2 attention block replaced by LN + MLP residual block
    # (the pretrained backbone is an external torch.hub module).
    # Grid = (row_tiles, layers). The residual-stream tile lives in `acc_ref`
    # (VMEM scratch) across the layer axis; per-layer weights stream in.
    l = pl.program_id(1)

    @pl.when(l == 0)
    def _():
        acc_ref[...] = x_ref[...]

    x = acc_ref[...]
    mu = jnp.mean(x, axis=-1, keepdims=True)
    var = jnp.mean((x - mu) ** 2, axis=-1, keepdims=True)
    y = (x - mu) * jax.lax.rsqrt(var + EPS)
    y = y * g_ref[...] + be_ref[...]
    # bf16 MXU matmuls, f32 accumulation; LN/GELU elementwise math stays f32.
    h = jnp.dot(y.astype(jnp.bfloat16), w1_ref[...],
                preferred_element_type=jnp.float32) + b1_ref[...]
    h = 0.5 * h * (1.0 + jnp.tanh(0.7978845608028654 * (h + 0.044715 * h * h * h)))
    out = x + jnp.dot(h.astype(jnp.bfloat16), w2_ref[...],
                      preferred_element_type=jnp.float32) + b2_ref[...]
    acc_ref[...] = out
    feat_ref[...] = out          # per-layer feature snapshot (written every step)


def feat_rows_kernel(wh_ref, x_ref, o_ref):
    # stage 1 of the separable feature upsample: contract the patch-row axis.
    # x block: [ph, pw*C], wh block: [TH, ph]  ->  [TH, pw*C]
    o_ref[...] = jnp.dot(wh_ref[...], x_ref[...].astype(jnp.bfloat16),
                         preferred_element_type=jnp.float32)


def feat_cols_kernel(wwt_ref, a_ref, o_ref):
    # stage 2: contract the patch-col axis; rows are flattened (layer,batch,C,H)
    # so the result is written directly in NCHW order (lane dim = W).
    o_ref[...] = jnp.dot(a_ref[...], wwt_ref[...],
                         preferred_element_type=jnp.float32)


def depth_head_kernel(tok_ref, pd_ref, wdbd_ref, bd_ref,
                      whd_ref, wwdt_ref, whu_ref, wwut_ref, o_ref):
    # TODO(synk): real DPTHead (reassemble / fusion convs) unavailable; this
    # fuses: prompt min/max normalization, linear depth projection, prompt
    # fusion, separable bilinear upsample (+ crop), sigmoid, denormalization.
    pd = pd_ref[...]                                              # [hp, wp]
    mn = jnp.min(jnp.min(pd, axis=1, keepdims=True), axis=0, keepdims=True)
    mx = jnp.max(jnp.max(pd, axis=1, keepdims=True), axis=0, keepdims=True)
    rng = mx - mn
    pdn = (pd - mn) / jnp.maximum(rng, EPS)                       # eps-guarded

    # depth logits from last-layer tokens: block-diagonal weight gives [ph, pw]
    # directly (no lane-width-1 output, no in-kernel reshape).
    logit = jnp.dot(tok_ref[...], wdbd_ref[...],
                    preferred_element_type=jnp.float32) + bd_ref[...]

    # separable bilinear downsample of the prompt to the token grid
    d1 = jnp.dot(whd_ref[...], pdn, preferred_element_type=jnp.float32)   # [ph, wp]
    d2 = jnp.dot(d1, wwdt_ref[...], preferred_element_type=jnp.float32)   # [ph, pw]

    z = logit + ALPHA * d2

    # separable bilinear upsample to the (already cropped) output resolution
    u1 = jnp.dot(whu_ref[...], z, preferred_element_type=jnp.float32)     # [H, pw]
    u2 = jnp.dot(u1, wwut_ref[...], preferred_element_type=jnp.float32)   # [H, W]

    # sigmoid via EUP exp + approximate reciprocal (keeps VALU path free)
    d = pl.reciprocal(1.0 + jnp.exp(-u2), approx=True)
    o_ref[...] = d * rng + mn                                     # denormalize depth


# ----------------------------- bilinear (align_corners=True) -----------------
def _interp_matrix_1d(out_size, in_size):
    M = np.zeros((out_size, in_size), np.float32)
    if in_size == 1:
        M[:, 0] = 1.0
        return M
    for o in range(out_size):
        s = 0.0 if out_size == 1 else o * (in_size - 1) / (out_size - 1)
        i0 = int(np.floor(s))
        i1 = min(i0 + 1, in_size - 1)
        f = s - i0
        M[o, i0] += 1.0 - f
        M[o, i1] += f
    return M


# ----------------------------- pallas wrappers --------------------------------
def pallas_patch_embed(patches_bf16, w_bf16, b_f32, tm):
    R, K = patches_bf16.shape
    C = w_bf16.shape[1]
    return pl.pallas_call(
        patch_embed_kernel,
        out_shape=jax.ShapeDtypeStruct((R, C), jnp.float32),
        grid=(R // tm,),
        in_specs=[pl.BlockSpec((tm, K), lambda i: (i, 0)),
                  pl.BlockSpec((K, C), lambda i: (0, 0)),
                  pl.BlockSpec((1, C), lambda i: (0, 0))],
        out_specs=pl.BlockSpec((tm, C), lambda i: (i, 0)),
        compiler_params=_cparams("parallel"),
    )(patches_bf16, w_bf16, b_f32)


def pallas_backbone(xseq, blocks, tm):
    # One pallas_call for all NUM_BLOCKS layers; outputs every layer's tokens.
    Rp, C = xseq.shape
    L, _, HID = blocks['w1'].shape
    return pl.pallas_call(
        fused_blocks_kernel,
        out_shape=jax.ShapeDtypeStruct((L, Rp, C), jnp.float32),
        grid=(Rp // tm, L),
        in_specs=[
            pl.BlockSpec((tm, C), lambda i, l: (i, 0)),          # only read at l==0
            pl.BlockSpec((None, 1, C), lambda i, l: (l, 0, 0)),
            pl.BlockSpec((None, 1, C), lambda i, l: (l, 0, 0)),
            pl.BlockSpec((None, C, HID), lambda i, l: (l, 0, 0)),
            pl.BlockSpec((None, 1, HID), lambda i, l: (l, 0, 0)),
            pl.BlockSpec((None, HID, C), lambda i, l: (l, 0, 0)),
            pl.BlockSpec((None, 1, C), lambda i, l: (l, 0, 0)),
        ],
        out_specs=pl.BlockSpec((None, tm, C), lambda i, l: (l, i, 0)),
        scratch_shapes=[pltpu.VMEM((tm, C), jnp.float32)],
        compiler_params=_cparams("parallel", "arbitrary"),
    )(xseq, blocks['gamma'], blocks['beta'], blocks['w1'], blocks['b1'],
      blocks['w2'], blocks['b2'])


def pallas_feature_upsample(tokens, ph, pw, H, W):
    # tokens: [L, N, T, C] f32  ->  [L, N, C, H, W] f32 via separable
    # align_corners bilinear interpolation (one gridded call per stage, all
    # layers/batches share the 1-D interpolation weights).
    L, N, T, C = tokens.shape
    wh = jnp.asarray(_interp_matrix_1d(H, ph), jnp.float32).astype(jnp.bfloat16)   # [H, ph]
    wwt = jnp.asarray(_interp_matrix_1d(W, pw).T, jnp.float32).astype(jnp.bfloat16)  # [pw, W]

    x_r = tokens.reshape(L * N, ph, pw * C)

    TH = H if H <= 256 else 256
    nh = pl.cdiv(H, TH)
    a = pl.pallas_call(
        feat_rows_kernel,
        out_shape=jax.ShapeDtypeStruct((L * N, H, pw * C), jnp.float32),
        grid=(L * N, nh),
        in_specs=[pl.BlockSpec((TH, ph), lambda g, h: (h, 0)),
                  pl.BlockSpec((None, ph, pw * C), lambda g, h: (g, 0, 0))],
        out_specs=pl.BlockSpec((None, TH, pw * C), lambda g, h: (g, h, 0)),
        compiler_params=_cparams("parallel", "parallel"),
    )(wh, x_r)

    # Re-layout the *small* intermediate (W/pw x smaller than the final output)
    # so stage 2 writes NCHW directly; bf16 cast fuses into the same XLA pass.
    # TODO(synk): this one small transpose stays in XLA (a pure in-kernel
    # lane<->sublane flip of the token tensor has no robust Mosaic lowering here).
    a_t = a.reshape(L * N, H, pw, C).transpose(0, 3, 1, 2)        # [L*N, C, H, pw]
    a_t = a_t.astype(jnp.bfloat16).reshape(L * N * C * H, pw)

    rows = L * N * C * H
    tm = 1024 if rows >= 1024 else _round_up(rows, 8)
    b = pl.pallas_call(
        feat_cols_kernel,
        out_shape=jax.ShapeDtypeStruct((rows, W), jnp.float32),
        grid=(pl.cdiv(rows, tm),),
        in_specs=[pl.BlockSpec((pw, W), lambda g: (0, 0)),
                  pl.BlockSpec((tm, pw), lambda g: (g, 0))],
        out_specs=pl.BlockSpec((tm, W), lambda g: (g, 0)),
        compiler_params=_cparams("parallel"),
    )(wwt, a_t)
    return b.reshape(L, N, C, H, W)


def pallas_depth_head(tok_last, pd3, params, ph, pw, hp, wp, H, W, Hp, Wp):
    # tok_last: [N, T, C] last-layer patch tokens; pd3: [N, hp, wp] prompt depth.
    N, T, C = tok_last.shape
    tok_r = tok_last.reshape(N, ph, pw * C)

    # block-diagonal projection weight: wdbd[q*C + c, q] = wd[c]
    wdbd = jnp.kron(jnp.eye(pw, dtype=jnp.float32), params['wd'][:, None])

    whd = jnp.asarray(_interp_matrix_1d(ph, hp))                  # [ph, hp]
    wwdt = jnp.asarray(_interp_matrix_1d(pw, wp).T)               # [wp, pw]
    # upsample to (Hp, Wp) then crop == use the first H rows / W cols of the
    # align_corners interpolation matrices.
    whu = jnp.asarray(_interp_matrix_1d(Hp, ph)[:H])              # [H, ph]
    wwut = jnp.asarray(_interp_matrix_1d(Wp, pw)[:W].T)           # [pw, W]

    return pl.pallas_call(
        depth_head_kernel,
        out_shape=jax.ShapeDtypeStruct((N, H, W), jnp.float32),
        grid=(N,),
        in_specs=[
            pl.BlockSpec((None, ph, pw * C), lambda n: (n, 0, 0)),
            pl.BlockSpec((None, hp, wp), lambda n: (n, 0, 0)),
            pl.BlockSpec((pw * C, pw), lambda n: (0, 0)),
            pl.BlockSpec((1, 1), lambda n: (0, 0)),
            pl.BlockSpec((ph, hp), lambda n: (0, 0)),
            pl.BlockSpec((wp, pw), lambda n: (0, 0)),
            pl.BlockSpec((H, ph), lambda n: (0, 0)),
            pl.BlockSpec((pw, W), lambda n: (0, 0)),
        ],
        out_specs=pl.BlockSpec((None, H, W), lambda n: (n, 0, 0)),
        compiler_params=_cparams("parallel"),
    )(tok_r, pd3, wdbd, params['bd'], whd, wwdt, whu, wwut)


# ----------------------------- parameters ------------------------------------
def make_params(key, H, W):
    pad_h = (PATCH - H % PATCH) % PATCH
    pad_w = (PATCH - W % PATCH) % PATCH
    ph, pw = (H + pad_h) // PATCH, (W + pad_w) // PATCH
    T = ph * pw
    ks = jax.random.split(key, 6 + 2 * NUM_BLOCKS)

    def nrm(k, shape, scale=0.02):
        return scale * jax.random.normal(k, shape, jnp.float32)

    mean = jnp.array([0.485, 0.456, 0.406], jnp.float32)
    std = jnp.array([0.229, 0.224, 0.225], jnp.float32)

    kdim = 3 * PATCH * PATCH
    w_patch = nrm(ks[0], (kdim, C_FEAT))
    b_patch = jnp.zeros((C_FEAT,), jnp.float32)

    # fold (x - mean)/std into the patch embedding:
    #   ((x - m)/s) @ W + b  ==  x @ (W / s) + (b - (m/s) @ W)
    m_vec = jnp.repeat(mean, PATCH * PATCH)
    s_vec = jnp.repeat(std, PATCH * PATCH)
    w_eff = (w_patch / s_vec[:, None]).astype(jnp.bfloat16)
    b_eff = (b_patch - (m_vec / s_vec) @ w_patch).reshape(1, C_FEAT)

    params = {
        'w_patch_eff': w_eff,
        'b_patch_eff': b_eff,
        'cls_token': nrm(ks[1], (1, 1, C_FEAT)),
        'pos_embed': nrm(ks[2], (1, T + 1, C_FEAT)),
        'wd': nrm(ks[3], (C_FEAT,)),
        'bd': jnp.zeros((1, 1), jnp.float32),
        'blocks': {
            'gamma': jnp.ones((NUM_BLOCKS, 1, C_FEAT), jnp.float32),
            'beta': jnp.zeros((NUM_BLOCKS, 1, C_FEAT), jnp.float32),
            'w1': jnp.stack([nrm(ks[4 + 2 * i], (C_FEAT, HIDDEN))
                             for i in range(NUM_BLOCKS)]).astype(jnp.bfloat16),
            'b1': jnp.zeros((NUM_BLOCKS, 1, HIDDEN), jnp.float32),
            'w2': jnp.stack([nrm(ks[5 + 2 * i], (HIDDEN, C_FEAT))
                             for i in range(NUM_BLOCKS)]).astype(jnp.bfloat16),
            'b2': jnp.zeros((NUM_BLOCKS, 1, C_FEAT), jnp.float32),
        },
    }
    return params


# ----------------------------- forward ----------------------------------------
def promptda_forward(image, prompt_depth, params):
    # image: [B, 3, H, W] (NCHW) ; prompt_depth: [B, 1, hp, wp]
    B, _, H, W = image.shape
    V = 1
    N = B
    pad_h = (PATCH - H % PATCH) % PATCH
    pad_w = (PATCH - W % PATCH) % PATCH
    Hp, Wp = H + pad_h, W + pad_w
    ph, pw = Hp // PATCH, Wp // PATCH
    T = ph * pw
    hp, wp = prompt_depth.shape[-2], prompt_depth.shape[-1]

    # reflect pad (requires pad < dim, true for H, W >= PATCH). The per-channel
    # (x - mean)/std normalization is folded into the patch-embed weights.
    x = jnp.pad(image, ((0, 0), (0, 0), (0, pad_h), (0, pad_w)),
                mode='reflect').astype(jnp.float32)

    # im2col patch extraction.
    # TODO(synk): the strided patch reshuffle stays in XLA; folding it into the
    # patch-embed kernel would require a gather-style manual DMA.
    patches = x.reshape(N, 3, ph, PATCH, pw, PATCH)
    patches = patches.transpose(0, 2, 4, 1, 3, 5).reshape(N * T, 3 * PATCH * PATCH)
    rows_tok = N * T
    tm_tok = min(256, _round_up(rows_tok, 8))
    rows_tok_p = _round_up(rows_tok, tm_tok)
    patches = jnp.pad(patches, ((0, rows_tok_p - rows_tok), (0, 0)))
    tok = pallas_patch_embed(patches.astype(jnp.bfloat16),
                             params['w_patch_eff'], params['b_patch_eff'], tm_tok)
    tok = tok[:rows_tok].reshape(N, T, C_FEAT)

    # cls token + positional embedding (tiny, host-side)
    cls = jnp.broadcast_to(params['cls_token'], (N, 1, C_FEAT))
    xseq = (jnp.concatenate([cls, tok], axis=1) + params['pos_embed'])
    R = N * (T + 1)
    xseq = xseq.reshape(R, C_FEAT)
    tm = min(256, _round_up(R, 8))
    Rp = _round_up(R, tm)
    xseq = jnp.pad(xseq, ((0, Rp - R), (0, 0)))

    # fused synthetic "get_intermediate_layers": all layers in one pallas_call
    feats_all = pallas_backbone(xseq, params['blocks'], tm)           # [L, Rp, C]
    feats_all = feats_all[:, :R, :].reshape(NUM_BLOCKS, N, T + 1, C_FEAT)
    feats_sel = feats_all[jnp.asarray(LAYER_IDXS)]                    # [L, N, T+1, C]
    patch_tokens = feats_sel[:, :, 1:, :]                             # [L, N, T, C]

    # depth head: prompt fusion + separable bilinear upsample + sigmoid + denorm
    pd3 = prompt_depth.reshape(N, hp, wp).astype(jnp.float32)
    depth = pallas_depth_head(patch_tokens[-1], pd3, params,
                              ph, pw, hp, wp, H, W, Hp, Wp)           # [N, H, W]
    depth_preds = depth.reshape(B, V, H, W)

    # intermediate features, bilinearly upsampled to (H, W), NCHW output
    feats_up = pallas_feature_upsample(patch_tokens, ph, pw, H, W)    # [L, N, C, H, W]
    feats_int = [feats_up[i] for i in range(len(LAYER_IDXS))]

    return {'features_mono_intermediate': feats_int,
            'depth_preds': [depth_preds],
            'match_probs': None}


# ----------------------------- main -------------------------------------------
if __name__ == "__main__":
    key = jax.random.PRNGKey(0)
    k_img, k_pd, k_par = jax.random.split(key, 3)

    B, H, W = 2, 30, 30               # H, W not multiples of 14 -> exercises padding
    hp, wp = 16, 16
    image = jax.random.uniform(k_img, (B, 3, H, W), jnp.float32)
    prompt_depth = jax.random.uniform(k_pd, (B, 1, hp, wp), jnp.float32,
                                      minval=0.5, maxval=3.0)

    params = make_params(k_par, H, W)
    out = promptda_forward(image, prompt_depth, params)
    jax.block_until_ready(out['depth_preds'][0])
    for f in out['features_mono_intermediate']:
        jax.block_until_ready(f)

    assert out['depth_preds'][0].shape == (B, 1, H, W)
    assert len(out['features_mono_intermediate']) == len(LAYER_IDXS)
    assert out['features_mono_intermediate'][0].shape == (B, C_FEAT, H, W)
    assert bool(jnp.all(jnp.isfinite(out['depth_preds'][0])))
    print("KERNEL_OK")
</pallas_src>

<mosaic_0001>
module attributes {stable_mosaic.version = 11 : i64} {
  func.func @patch_embed_kernel(%arg0: i32, %arg1: memref<24x588xbf16, #tpu.memory_space<vmem>>, %arg2: memref<588x128xbf16, #tpu.memory_space<vmem>>, %arg3: memref<1x128xf32, #tpu.memory_space<vmem>>, %arg4: memref<24x128xf32, #tpu.memory_space<vmem>>) attributes {dimension_semantics = [#tpu.dimension_semantics<parallel>], iteration_bounds = array<i64: 1>, scalar_prefetch = 0 : i64, scratch_operands = 0 : i64, tpu.core_type = #tpu.core_type<tc>, window_params = [{transform_indices = @transform_0, window_bounds = array<i64: 24, 588>}, {pipeline_mode = #tpu.pipeline_mode<synchronous>, transform_indices = @transform_1, window_bounds = array<i64: 588, 128>}, {pipeline_mode = #tpu.pipeline_mode<synchronous>, transform_indices = @transform_2, window_bounds = array<i64: 1, 128>}, {transform_indices = @transform_3, window_bounds = array<i64: 24, 128>}]} {
    %c0 = arith.constant 0 : index
    %c0_0 = arith.constant 0 : index
    %0 = vector.load %arg1[%c0, %c0_0] : memref<24x588xbf16, #tpu.memory_space<vmem>>, vector<24x588xbf16>
    %c0_1 = arith.constant 0 : index
    %c0_2 = arith.constant 0 : index
    %1 = vector.load %arg2[%c0_1, %c0_2] : memref<588x128xbf16, #tpu.memory_space<vmem>>, vector<588x128xbf16>
    %cst = arith.constant dense<0.000000e+00> : vector<24x128xf32>
    %2 = tpu.matmul %0, %1, %cst {dimension_numbers = #tpu.dot_dimension_numbers<[1], [0], [0], [1], [0, 0, 1, 1], [], []>} : vector<24x588xbf16>, vector<588x128xbf16>, vector<24x128xf32> -> vector<24x128xf32>
    %c0_3 = arith.constant 0 : index
    %c0_4 = arith.constant 0 : index
    %3 = vector.load %arg3[%c0_3, %c0_4] : memref<1x128xf32, #tpu.memory_space<vmem>>, vector<1x128xf32>
    %4 = vector.broadcast %3 : vector<1x128xf32> to vector<24x128xf32>
    %5 = arith.addf %2, %4 : vector<24x128xf32>
    %c0_5 = arith.constant 0 : index
    %c0_6 = arith.constant 0 : index
    %6 = vector.load %arg4[%c0_5, %c0_6] : memref<24x128xf32, #tpu.memory_space<vmem>>, vector<24x128xf32>
    tpu.vector_store %arg4[%c0_5, %c0_6], %5 {strides = array<i32>} : memref<24x128xf32, #tpu.memory_space<vmem>>, vector<24x128xf32>,
    return
  }
  func.func @transform_0(%arg0: i32) -> (i32, i32) {
    %c0_i32 = arith.constant 0 : i32
    %c0_i32_0 = arith.constant 0 : i32
    return %arg0, %c0_i32 : i32, i32
  }
  func.func @transform_1(%arg0: i32) -> (i32, i32) {
    %c0_i32 = arith.constant 0 : i32
    %c0_i32_0 = arith.constant 0 : i32
    %c0_i32_1 = arith.constant 0 : i32
    return %c0_i32, %c0_i32_0 : i32, i32
  }
  func.func @transform_2(%arg0: i32) -> (i32, i32) {
    %c0_i32 = arith.constant 0 : i32
    %c0_i32_0 = arith.constant 0 : i32
    %c0_i32_1 = arith.constant 0 : i32
    return %c0_i32, %c0_i32_0 : i32, i32
  }
  func.func @transform_3(%arg0: i32) -> (i32, i32) {
    %c0_i32 = arith.constant 0 : i32
    %c0_i32_0 = arith.constant 0 : i32
    return %arg0, %c0_i32 : i32, i32
  }
}

</mosaic_0001>

<llo_original>
// kernel: tpu_custom_call.1
$region0: #{tpu_custom_call.1}
  #allocation0 [shape = 'u32[]', space=smem, size = 0x4, offset = 0x4, fixed_abs, tag = 'smem constant byte address 0x4 - core index']
  #allocation1 [shape = 'u32[72,128]{1,0:T(1,128)}', space=vmem, size = 0x9000, scoped, tag = 'internal scratch']
  %s0 = inlined_call_operand.hbm [shape: bf16[24,588], index: 0, kind: input, shape index: {}]
  %s1 = inlined_call_operand.hbm [shape: bf16[588,128], index: 1, kind: input, shape index: {}]
  %s2 = inlined_call_operand.vmem [shape: f32[1,128], index: 2, kind: input, shape index: {}]
  %s3 = inlined_call_operand.hbm [shape: f32[24,128], index: 3, kind: output, shape index: {}]
  %s4 = sld [smem:[#allocation0]]
  $region30: #{tpu_custom_call.1} parent=0
    _
  %s6 = ssub.s32 1, %s4
  %s7 = scalar_select 0, %s6, %s4
  $region1: #{tpu_custom_call.1} parent=0
    #allocation2 [shape = 'u8[30720]{0}', space=vmem, size = 0x7800, scoped, tag = 'input window, operand 0, single buffered']
    #allocation3 [shape = 's32[1]{0}', space=sflag, size = 0x4, scoped, tag = 'scoped memory for tpu_custom_call.1']
    #allocation4 [shape = 's32[1]{0}', space=sflag, size = 0x4, scoped, tag = 'scoped memory for tpu_custom_call.1']
    #allocation5 [shape = 'u8[151552]{0}', space=vmem, size = 0x25000, scoped, tag = 'input window, operand 1, single buffered']
    #allocation6 [shape = 's32[1]{0}', space=sflag, size = 0x4, scoped, tag = 'scoped memory for tpu_custom_call.1']
    #allocation7 [shape = 'u8[12288]{0}', space=vmem, size = 0x3000, scoped, tag = 'output window, operand 0, single buffered']
    %8 = vsyncpa [#allocation3], 0
    %9 = vsyncpa [#allocation6], 0
    %10 = vsyncpa [#allocation4], 0
    // Predicated region
    $region2: #{tpu_custom_call.1} parent=1 // pred_check
      _
    $region3: #{tpu_custom_call.1} parent=1 // pred_check_branch
      %12 = sbr.rel (0) target = $region5
    $region4: #{tpu_custom_call.1} parent=1 // pred_region
      %14 = vsyncadd [#allocation3], 0
      %s15 = sshll.u32 %s0, 4
      %s16 = int_to_ptr.hbm [resolvable:$true] %s15
      %s17 = sshll.u32 [#allocation2], 4
      %s18 = int_to_ptr.vmem [resolvable:$true] %s17
      %23 = dma.hbm_to_vmem [thread:$0]  %s16, 960, %s18, [#allocation3], 320, 320, 20
    $region5: #{tpu_custom_call.1} parent=1 // pred_fallthru
      _
    // Predicated region
    $region6: #{tpu_custom_call.1} parent=1 // pred_check
      _
    $region7: #{tpu_custom_call.1} parent=1 // pred_check_branch
      %25 = sbr.rel (0) target = $region9
    $region8: #{tpu_custom_call.1} parent=1 // pred_region
      %27 = vsyncadd [#allocation6], 0
      %s28 = sshll.u32 %s1, 4
      %s29 = int_to_ptr.hbm [resolvable:$true] %s28
      %s30 = sshll.u32 [#allocation5], 4
      %s31 = int_to_ptr.vmem [resolvable:$true] %s30
      %36 = dma.hbm_to_vmem [thread:$0]  %s29, 4736, %s31, [#allocation6], 64, 64, 4
    $region9: #{tpu_custom_call.1} parent=1 // pred_fallthru
      _
    // Predicated region
    $region10: #{tpu_custom_call.1} parent=1 // pred_check
      _
    $region11: #{tpu_custom_call.1} parent=1 // pred_check_branch
      %38 = sbr.rel (0) target = $region13
    $region12: #{tpu_custom_call.1} parent=1 // pred_region
      _
    $region13: #{tpu_custom_call.1} parent=1 // pred_fallthru
      _
    // Predicated region
    $region14: #{tpu_custom_call.1} parent=1 // pred_check
      _
    $region15: #{tpu_custom_call.1} parent=1 // pred_check_branch
      %40 = sbr.rel (0) target = $region17
    $region16: #{tpu_custom_call.1} parent=1 // pred_region
      %42 = dma.done [#allocation3], 960
    $region17: #{tpu_custom_call.1} parent=1 // pred_fallthru
      _
    // Predicated region
    $region18: #{tpu_custom_call.1} parent=1 // pred_check
      _
    $region19: #{tpu_custom_call.1} parent=1 // pred_check_branch
      %44 = sbr.rel (0) target = $region21
    $region20: #{tpu_custom_call.1} parent=1 // pred_region
      %46 = dma.done [#allocation6], 4736
    $region21: #{tpu_custom_call.1} parent=1 // pred_fallthru
      _
    %v48 = vld [vmem:[#allocation2] sm:$0xff]
    %v49 = vld [vmem:[#allocation2 + $0x8] sm:$0xff]
    %v50 = vld [vmem:[#allocation2 + $0x10] sm:$0xf]
    %v51 = vld [vmem:[#allocation2 + $0x14] sm:$0xff]
    %v52 = vld [vmem:[#allocation2 + $0x1c] sm:$0xff]
    %v53 = vld [vmem:[#allocation2 + $0x24] sm:$0xf]
    %v54 = vld [vmem:[#allocation2 + $0x28] sm:$0xff]
    %v55 = vld [vmem:[#allocation2 + $0x30] sm:$0xff]
    %v56 = vld [vmem:[#allocation2 + $0x38] sm:$0xf]
    %v57 = vld [vmem:[#allocation5] sm:$0xf]
    %v58 = vld [vmem:[#allocation5 + $0x4] sm:$0xf]
    %v59 = vld [vmem:[#allocation5 + $0x8] sm:$0xf]
    %v60 = vld [vmem:[#allocation5 + $0xc] sm:$0xf]
    %v61 = vld [vmem:[#allocation5 + $0x10] sm:$0xf]
    %v62 = vld [vmem:[#allocation5 + $0x14] sm:$0xf]
    %v63 = vld [vmem:[#allocation5 + $0x18] sm:$0xf]
    %v64 = vld [vmem:[#allocation5 + $0x1c] sm:$0xf]
    %v65 = vld [vmem:[#allocation5 + $0x20] sm:$0xf]
    %v66 = vld [vmem:[#allocation5 + $0x24] sm:$0xf]
    %v67 = vld [vmem:[#allocation5 + $0x28] sm:$0xf]
    %v68 = vld [vmem:[#allocation5 + $0x2c] sm:$0xf]
    %v69 = vld [vmem:[#allocation5 + $0x30] sm:$0xf]
    %v70 = vld [vmem:[#allocation5 + $0x34] sm:$0xf]
    %v71 = vld [vmem:[#allocation5 + $0x38] sm:$0xf]
    %v72 = vld [vmem:[#allocation5 + $0x3c] sm:$0xf]
    %v73 = vld [vmem:[#allocation5 + $0x40] sm:$0xf]
    %v74 = vld [vmem:[#allocation5 + $0x44] sm:$0xf]
    %v75 = vld [vmem:[#allocation5 + $0x48] sm:$0xf]
    %v76 = vld [vmem:[#allocation5 + $0x4c] sm:$0xf]
    %v77 = vld [vmem:[#allocation5 + $0x50] sm:$0xf]
    %v78 = vld [vmem:[#allocation5 + $0x54] sm:$0xf]
    %v79 = vld [vmem:[#allocation5 + $0x58] sm:$0xf]
    %v80 = vld [vmem:[#allocation5 + $0x5c] sm:$0xf]
    %v81 = vld [vmem:[#allocation5 + $0x60] sm:$0xf]
    %v82 = vld [vmem:[#allocation5 + $0x64] sm:$0xf]
    %v83 = vld [vmem:[#allocation5 + $0x68] sm:$0xf]
    %v84 = vld [vmem:[#allocation5 + $0x6c] sm:$0xf]
    %v85 = vld [vmem:[#allocation5 + $0x70] sm:$0xf]
    %v86 = vld [vmem:[#allocation5 + $0x74] sm:$0xf]
    %v87 = vld [vmem:[#allocation5 + $0x78] sm:$0xf]
    %v88 = vld [vmem:[#allocation5 + $0x7c] sm:$0xf]
    %v89 = vld [vmem:[#allocation5 + $0x80] sm:$0xf]
    %v90 = vld [vmem:[#allocation5 + $0x84] sm:$0xf]
    %v91 = vld [vmem:[#allocation5 + $0x88] sm:$0xf]
    %v92 = vld [vmem:[#allocation5 + $0x8c] sm:$0xf]
    %v93 = vld [vmem:[#allocation5 + $0x90] sm:$0xf]
    %v94 = vld [vmem:[#allocation5 + $0x94] sm:$0xf]
    %v95 = vld [vmem:[#allocation5 + $0x98] sm:$0xf]
    %v96 = vld [vmem:[#allocation5 + $0x9c] sm:$0xf]
    %v97 = vld [vmem:[#allocation5 + $0xa0] sm:$0xf]
    %v98 = vld [vmem:[#allocation5 + $0xa4] sm:$0xf]
    %v99 = vld [vmem:[#allocation5 + $0xa8] sm:$0xf]
    %v100 = vld [vmem:[#allocation5 + $0xac] sm:$0xf]
    %v101 = vld [vmem:[#allocation5 + $0xb0] sm:$0xf]
    %v102 = vld [vmem:[#allocation5 + $0xb4] sm:$0xf]
    %v103 = vld [vmem:[#allocation5 + $0xb8] sm:$0xf]
    %v104 = vld [vmem:[#allocation5 + $0xbc] sm:$0xf]
    %v105 = vld [vmem:[#allocation5 + $0xc0] sm:$0xf]
    %v106 = vld [vmem:[#allocation5 + $0xc4] sm:$0xf]
    %v107 = vld [vmem:[#allocation5 + $0xc8] sm:$0xf]
    %v108 = vld [vmem:[#allocation5 + $0xcc] sm:$0xf]
    %v109 = vld [vmem:[#allocation5 + $0xd0] sm:$0xf]
    %v110 = vld [vmem:[#allocation5 + $0xd4] sm:$0xf]
    %v111 = vld [vmem:[#allocation5 + $0xd8] sm:$0xf]
    %v112 = vld [vmem:[#allocation5 + $0xdc] sm:$0xf]
    %v113 = vld [vmem:[#allocation5 + $0xe0] sm:$0xf]
    %v114 = vld [vmem:[#allocation5 + $0xe4] sm:$0xf]
    %v115 = vld [vmem:[#allocation5 + $0xe8] sm:$0xf]
    %v116 = vld [vmem:[#allocation5 + $0xec] sm:$0xf]
    %v117 = vld [vmem:[#allocation5 + $0xf0] sm:$0xf]
    %v118 = vld [vmem:[#allocation5 + $0xf4] sm:$0xf]
    %v119 = vld [vmem:[#allocation5 + $0xf8] sm:$0xf]
    %v120 = vld [vmem:[#allocation5 + $0xfc] sm:$0xf]
    %v121 = vld [vmem:[#allocation5 + $0x100] sm:$0xf]
    %v122 = vld [vmem:[#allocation5 + $0x104] sm:$0xf]
    %v123 = vld [vmem:[#allocation5 + $0x108] sm:$0xf]
    %v124 = vld [vmem:[#allocation5 + $0x10c] sm:$0xf]
    %v125 = vld [vmem:[#allocation5 + $0x110] sm:$0xf]
    %v126 = vld [vmem:[#allocation5 + $0x114] sm:$0xf]
    %v127 = vld [vmem:[#allocation5 + $0x118] sm:$0xf]
    %v128 = vld [vmem:[#allocation5 + $0x11c] sm:$0xf]
    %v129 = vld [vmem:[#allocation5 + $0x120] sm:$0xf]
    %v130 = vld [vmem:[#allocation5 + $0x124] sm:$0x3]
    %v131 = vld [vmem:[%s2] sm:$0x1]
    %v133 = vperm.slane %v131, 0
    %v144 = vunpack.c.l.b16 %v48
    %v145 = vunpack.c.h.b16 %v48
    %v146 = vunpack.c.l.b16 %v49
    %v147 = vunpack.c.h.b16 %v49
    %v148 = vunpack.c.l.b16 %v50
    %v149 = vunpack.c.l.b16 %v51
    %v150 = vunpack.c.h.b16 %v51
    %v151 = vunpack.c.l.b16 %v52
    %v152 = vunpack.c.h.b16 %v52
    %v153 = vunpack.c.l.b16 %v53
    %v154 = vunpack.c.l.b16 %v54
    %v155 = vunpack.c.h.b16 %v54
    %v156 = vunpack.c.l.b16 %v55
    %v157 = vunpack.c.h.b16 %v55
    %v158 = vunpack.c.l.b16 %v56
    %v159 = vpack.c.b16 %v149, %v144
    %v160 = vpack.c.b16 %v150, %v145
    %v161 = vpack.c.b16 %v151, %v146
    %v162 = vpack.c.b16 %v152, %v147
    %v163 = vpack.c.b16 %v153, %v148
    %v164 = vpack.c.b16 %v154, %v154
    %v165 = vpack.c.b16 %v155, %v155
    %v166 = vpack.c.b16 %v156, %v156
    %v167 = vpack.c.b16 %v157, %v157
    %v168 = vpack.c.b16 %v158, %v158
    %v251 = vunpack.c.l.b16 %v57
    %v252 = vunpack.c.l.b16 %v58
    %v253 = vunpack.c.l.b16 %v59
    %v254 = vunpack.c.l.b16 %v60
    %v255 = vunpack.c.l.b16 %v61
    %v256 = vunpack.c.l.b16 %v62
    %v257 = vunpack.c.l.b16 %v63
    %v258 = vunpack.c.l.b16 %v64
    %v259 = vunpack.c.l.b16 %v65
    %v260 = vunpack.c.l.b16 %v66
    %v261 = vunpack.c.l.b16 %v67
    %v262 = vunpack.c.l.b16 %v68
    %v263 = vunpack.c.l.b16 %v69
    %v264 = vunpack.c.l.b16 %v70
    %v265 = vunpack.c.l.b16 %v71
    %v266 = vunpack.c.l.b16 %v72
    %v267 = vunpack.c.l.b16 %v73
    %v268 = vunpack.c.l.b16 %v74
    %v269 = vunpack.c.l.b16 %v75
    %v270 = vunpack.c.l.b16 %v76
    %v271 = vunpack.c.l.b16 %v77
    %v272 = vunpack.c.l.b16 %v78
    %v273 = vunpack.c.l.b16 %v79
    %v274 = vunpack.c.l.b16 %v80
    %v275 = vunpack.c.l.b16 %v81
    %v276 = vunpack.c.l.b16 %v82
    %v277 = vunpack.c.l.b16 %v83
    %v278 = vunpack.c.l.b16 %v84
    %v279 = vunpack.c.l.b16 %v85
    %v280 = vunpack.c.l.b16 %v86
    %v281 = vunpack.c.l.b16 %v87
    %v282 = vunpack.c.l.b16 %v88
    %v283 = vunpack.c.l.b16 %v89
    %v284 = vunpack.c.l.b16 %v90
    %v285 = vunpack.c.l.b16 %v91
    %v286 = vunpack.c.l.b16 %v92
    %v287 = vunpack.c.l.b16 %v93
    %v288 = vunpack.c.l.b16 %v94
    %v289 = vunpack.c.l.b16 %v95
    %v290 = vunpack.c.l.b16 %v96
    %v291 = vunpack.c.l.b16 %v97
    %v292 = vunpack.c.l.b16 %v98
    %v293 = vunpack.c.l.b16 %v99
    %v294 = vunpack.c.l.b16 %v100
    %v295 = vunpack.c.l.b16 %v101
    %v296 = vunpack.c.l.b16 %v102
    %v297 = vunpack.c.l.b16 %v103
    %v298 = vunpack.c.l.b16 %v104
    %v299 = vunpack.c.l.b16 %v105
    %v300 = vunpack.c.l.b16 %v106
    %v301 = vunpack.c.l.b16 %v107
    %v302 = vunpack.c.l.b16 %v108
    %v303 = vunpack.c.l.b16 %v109
    %v304 = vunpack.c.l.b16 %v110
    %v305 = vunpack.c.l.b16 %v111
    %v306 = vunpack.c.l.b16 %v112
    %v307 = vunpack.c.l.b16 %v113
    %v308 = vunpack.c.l.b16 %v114
    %v309 = vunpack.c.l.b16 %v115
    %v310 = vunpack.c.l.b16 %v116
    %v311 = vunpack.c.l.b16 %v117
    %v312 = vunpack.c.l.b16 %v118
    %v313 = vunpack.c.l.b16 %v119
    %v314 = vunpack.c.l.b16 %v120
    %v315 = vunpack.c.l.b16 %v121
    %v316 = vunpack.c.l.b16 %v122
    %v317 = vunpack.c.l.b16 %v123
    %v318 = vunpack.c.l.b16 %v124
    %v319 = vunpack.c.l.b16 %v125
    %v320 = vunpack.c.l.b16 %v126
    %v321 = vunpack.c.l.b16 %v127
    %v322 = vunpack.c.l.b16 %v128
    %v323 = vunpack.c.l.b16 %v129
    %v324 = vunpack.c.l.b16 %v130
    %v325 = vpack.c.b16 %v252, %v251
    %v326 = vpack.c.b16 %v254, %v253
    %v327 = vpack.c.b16 %v256, %v255
    %v328 = vpack.c.b16 %v258, %v257
    %v329 = vpack.c.b16 %v260, %v259
    %v330 = vpack.c.b16 %v262, %v261
    %v331 = vpack.c.b16 %v264, %v263
    %v332 = vpack.c.b16 %v266, %v265
    %v333 = vpack.c.b16 %v268, %v267
    %v334 = vpack.c.b16 %v270, %v269
    %v335 = vpack.c.b16 %v272, %v271
    %v336 = vpack.c.b16 %v274, %v273
    %v337 = vpack.c.b16 %v276, %v275
    %v338 = vpack.c.b16 %v278, %v277
    %v339 = vpack.c.b16 %v280, %v279
    %v340 = vpack.c.b16 %v282, %v281
    %v341 = vpack.c.b16 %v284, %v283
    %v342 = vpack.c.b16 %v286, %v285
    %v343 = vpack.c.b16 %v288, %v287
    %v344 = vpack.c.b16 %v290, %v289
    %v345 = vpack.c.b16 %v292, %v291
    %v346 = vpack.c.b16 %v294, %v293
    %v347 = vpack.c.b16 %v296, %v295
    %v348 = vpack.c.b16 %v298, %v297
    %v349 = vpack.c.b16 %v300, %v299
    %v350 = vpack.c.b16 %v302, %v301
    %v351 = vpack.c.b16 %v304, %v303
    %v352 = vpack.c.b16 %v306, %v305
    %v353 = vpack.c.b16 %v308, %v307
    %v354 = vpack.c.b16 %v310, %v309
    %v355 = vpack.c.b16 %v312, %v311
    %v356 = vpack.c.b16 %v314, %v313
    %v357 = vpack.c.b16 %v316, %v315
    %v358 = vpack.c.b16 %v318, %v317
    %v359 = vpack.c.b16 %v320, %v319
    %v360 = vpack.c.b16 %v322, %v321
    %v361 = vpack.c.b16 %v324, %v323
    %vm398 = vcmask 621568
    %v400 = vsel %vm398, %v163, 0
    %v403 = vsel %vm398, %v168, 0
    %vm405 = vcmask 1045504
    %v407 = vsel %vm405, %v361, 0
    %409 = vmatpush.bf16.msra.mxu0 %v332
    %410 = vmatpush.bf16.msra.mxu0 %v331
    %411 = vmatpush.bf16.msra.mxu0 %v330
    %412 = vmatpush.bf16.msra.mxu0 %v329
    %413 = vmatpush.bf16.msra.mxu0 %v328
    %414 = vmatpush.bf16.msra.mxu0 %v327
    %415 = vmatpush.bf16.msra.mxu0 %v326
    %416 = vmatpush.bf16.msra.mxu0 %v325
    %417 = vmatmul.bf16.gmra.mxu0 %v159
    %v418 = vpop.f32.mrf.mxu0
    %v419 = vadd.f32 %v133, %v418
    %v420 = vpop.f32.mrf.mxu0
    %v421 = vadd.f32 %v133, %v420
    %422 = vmatmul.bf16.gmra.mxu0 %v164
    %v423 = vpop.f32.mrf.mxu0
    %v424 = vadd.f32 %v133, %v423
    %v425 = vpop.f32.mrf.mxu0
    %426 = vdwg.mxu0
    %427 = vmatpush.bf16.msra.mxu0 %v340
    %428 = vmatpush.bf16.msra.mxu0 %v339
    %429 = vmatpush.bf16.msra.mxu0 %v338
    %430 = vmatpush.bf16.msra.mxu0 %v337
    %431 = vmatpush.bf16.msra.mxu0 %v336
    %432 = vmatpush.bf16.msra.mxu0 %v335
    %433 = vmatpush.bf16.msra.mxu0 %v334
    %434 = vmatpush.bf16.msra.mxu0 %v333
    %435 = vmatmul.bf16.gmra.mxu0 %v160
    %v436 = vpop.f32.mrf.mxu0
    %v437 = vadd.f32 %v419, %v436
    %v438 = vpop.f32.mrf.mxu0
    %v439 = vadd.f32 %v421, %v438
    %440 = vmatmul.bf16.gmra.mxu0 %v165
    %v441 = vpop.f32.mrf.mxu0
    %v442 = vadd.f32 %v424, %v441
    %v443 = vpop.f32.mrf.mxu0
    %444 = vdwg.mxu0
    %445 = vmatpush.bf16.msra.mxu0 %v348
    %446 = vmatpush.bf16.msra.mxu0 %v347
    %447 = vmatpush.bf16.msra.mxu0 %v346
    %448 = vmatpush.bf16.msra.mxu0 %v345
    %449 = vmatpush.bf16.msra.mxu0 %v344
    %450 = vmatpush.bf16.msra.mxu0 %v343
    %451 = vmatpush.bf16.msra.mxu0 %v342
    %452 = vmatpush.bf16.msra.mxu0 %v341
    %453 = vmatmul.bf16.gmra.mxu0 %v161
    %v454 = vpop.f32.mrf.mxu0
    %v455 = vadd.f32 %v437, %v454
    %v456 = vpop.f32.mrf.mxu0
    %v457 = vadd.f32 %v439, %v456
    %458 = vmatmul.bf16.gmra.mxu0 %v166
    %v459 = vpop.f32.mrf.mxu0
    %v460 = vadd.f32 %v442, %v459
    %v461 = vpop.f32.mrf.mxu0
    %462 = vdwg.mxu0
    %463 = vmatpush.bf16.msra.mxu0 %v356
    %464 = vmatpush.bf16.msra.mxu0 %v355
    %465 = vmatpush.bf16.msra.mxu0 %v354
    %466 = vmatpush.bf16.msra.mxu0 %v353
    %467 = vmatpush.bf16.msra.mxu0 %v352
    %468 = vmatpush.bf16.msra.mxu0 %v351
    %469 = vmatpush.bf16.msra.mxu0 %v350
    %470 = vmatpush.bf16.msra.mxu0 %v349
    %471 = vmatmul.bf16.gmra.mxu0 %v162
    %v472 = vpop.f32.mrf.mxu0
    %v473 = vadd.f32 %v455, %v472
    %v474 = vpop.f32.mrf.mxu0
    %v475 = vadd.f32 %v457, %v474
    %476 = vmatmul.bf16.gmra.mxu0 %v167
    %v477 = vpop.f32.mrf.mxu0
    %v478 = vadd.f32 %v460, %v477
    %v479 = vpop.f32.mrf.mxu0
    %480 = vdwg.mxu0
    %481 = vmatpush.bf16.msra.mxu0 0
    %482 = vmatpush.bf16.msra.mxu0 0
    %483 = vmatpush.bf16.msra.mxu0 0
    %484 = vmatpush.bf16.msra.mxu0 %v407
    %485 = vmatpush.bf16.msra.mxu0 %v360
    %486 = vmatpush.bf16.msra.mxu0 %v359
    %487 = vmatpush.bf16.msra.mxu0 %v358
    %488 = vmatpush.bf16.msra.mxu0 %v357
    %489 = vmatmul.bf16.gmra.mxu0 %v400
    %v490 = vpop.f32.mrf.mxu0
    %v491 = vadd.f32 %v473, %v490
    %v492 = vpop.f32.mrf.mxu0
    %v493 = vadd.f32 %v475, %v492
    %494 = vmatmul.bf16.gmra.mxu0 %v403
    %v495 = vpop.f32.mrf.mxu0
    %v496 = vadd.f32 %v478, %v495
    %v497 = vpop.f32.mrf.mxu0
    %498 = vdwg.mxu0
    %499 = vst [vmem:[#allocation7] sm:$0xff] %v491
    %500 = vst [vmem:[#allocation7 + $0x8] sm:$0xff] %v493
    %501 = vst [vmem:[#allocation7 + $0x10] sm:$0xff] %v496
    // Predicated region
    $region22: #{tpu_custom_call.1} parent=1 // pred_check
      _
    $region23: #{tpu_custom_call.1} parent=1 // pred_check_branch
      %503 = sbr.rel (0) target = $region25
    $region24: #{tpu_custom_call.1} parent=1 // pred_region
      %505 = vsyncadd [#allocation4], 0
      %s506 = sshll.u32 [#allocation7], 4
      %s507 = int_to_ptr.vmem [resolvable:$true] %s506
      %s508 = sshll.u32 %s3, 4
      %s509 = int_to_ptr.hbm [resolvable:$true] %s508
      %514 = dma.vmem_to_hbm [thread:$0]  %s507, 384, %s509, [#allocation4], 128, 128, 8
    $region25: #{tpu_custom_call.1} parent=1 // pred_fallthru
      _
    // Predicated region
    $region26: #{tpu_custom_call.1} parent=1 // pred_check
      _
    $region27: #{tpu_custom_call.1} parent=1 // pred_check_branch
      %516 = sbr.rel (0) target = $region29
    $region28: #{tpu_custom_call.1} parent=1 // pred_region
      %518 = dma.done [#allocation4], 384
    $region29: #{tpu_custom_call.1} parent=1 // pred_fallthru
      _
    %519 = vsyncpa [#allocation3], 1
    %520 = vsyncpa [#allocation6], 1
    %521 = vsyncpa [#allocation4], 1

</llo_original>
